<compile_context>
chip_gen: v7x
topology: tpu7x:2x2x1
jax: 0.10.0
libtpu: 0.0.40
codegen_flags: <defaults>
</compile_context>

<pallas_src>
import functools

import jax
import jax.numpy as jnp
from jax.experimental import pallas as pl
from jax.experimental.pallas import tpu as pltpu


def _round_up(x, m):
    return ((x + m - 1) // m) * m


def _discriminator_kernel(x_ref, w1_ref, b1_ref, w2_ref, b2_ref, w3_ref, b3_ref,
                          o_ref):
    """Fused MLP on one row tile:
    (x @ W1 + b1) -> LeakyReLU -> (@ W2 + b2) -> LeakyReLU -> (@ W3pad + b3pad).
    """
    # In-kernel cast to the compute dtype (x is streamed at its native width;
    # no wrapper-side astype pass over HBM).
    x = x_ref[...].astype(w1_ref.dtype)

    # Layer 1: Linear(pacdim, d1) + LeakyReLU(0.2). f32 accumulation on the MXU.
    h1 = jnp.dot(x, w1_ref[...], preferred_element_type=jnp.float32) + b1_ref[...]
    h1 = jnp.maximum(h1, 0.2 * h1)
    # TODO(synk): Dropout(0.5) is identity here (eval-mode); training-mode
    # dropout would need pltpu.prng_seed + pltpu.prng_random_bits masking and
    # 1/(1-p) scaling.

    # Layer 2: Linear(d1, d2) + LeakyReLU(0.2).
    h2 = jnp.dot(h1.astype(w2_ref.dtype), w2_ref[...],
                 preferred_element_type=jnp.float32) + b2_ref[...]
    h2 = jnp.maximum(h2, 0.2 * h2)

    # Final layer: Linear(d2, 1) done as an MXU matmul against a (d2, 128)
    # zero-padded w3 -> lane-dense (tm, 128) output block (column 0 is the
    # real result, columns 1..127 are zeros).
    out = jnp.dot(h2, w3_ref[...], preferred_element_type=jnp.float32) + b3_ref[...]
    o_ref[...] = out.astype(o_ref.dtype)


def prepare_params(params, *, compute_dtype=jnp.float32):
    """One-time (model-setup) parameter preparation:
      * cast W1 / W2 to `compute_dtype` (f32 accumulation stays in-kernel),
      * zero-pad hidden dims d1, d2 up to multiples of 128 (MXU-friendly,
        mathematically identical output),
      * zero-pad w3 to (d2p, 128) and b3 to (1, 128) so the final layer is a
        lane-dense MXU matmul.
    Biases stay float32."""
    w1, b1, w2, b2, w3, b3 = params
    pacdim, d1 = w1.shape
    d2 = w2.shape[1]
    d1p = _round_up(d1, 128)
    d2p = _round_up(d2, 128)

    w1p = jnp.zeros((pacdim, d1p), compute_dtype).at[:, :d1].set(
        w1.astype(compute_dtype))
    b1p = jnp.zeros((1, d1p), jnp.float32).at[:, :d1].set(b1.reshape(1, d1))
    w2p = jnp.zeros((d1p, d2p), compute_dtype).at[:d1, :d2].set(
        w2.astype(compute_dtype))
    b2p = jnp.zeros((1, d2p), jnp.float32).at[:, :d2].set(b2.reshape(1, d2))
    w3p = jnp.zeros((d2p, 128), jnp.float32).at[:d2, :1].set(w3.reshape(d2, 1))
    b3p = jnp.zeros((1, 128), jnp.float32).at[:, :1].set(b3.reshape(1, 1))
    return (w1p, b1p, w2p, b2p, w3p, b3p)


def discriminator_forward(x, prepared_params, pac, *, tile_rows=1024):
    """Apply the Discriminator. x: (B, input_dim). Returns (B // pac, 1) f32."""
    B, input_dim = x.shape
    assert B % pac == 0, "batch must be divisible by pac"
    pacdim = input_dim * pac
    n_rows = B // pac
    x_p = x.reshape(n_rows, pacdim)  # == input_.view(-1, self.pacdim); free reshape

    w1p, b1p, w2p, b2p, w3p, b3p = prepared_params
    assert w1p.shape[0] == pacdim, "params prepared for a different pacdim"
    d1p = w1p.shape[1]
    d2p = w2p.shape[1]

    x_itemsize = jnp.dtype(x.dtype).itemsize
    w_itemsize = jnp.dtype(w1p.dtype).itemsize

    # Row tile: aligned to 8 sublanes (16 if x is sub-32-bit so packed rows
    # stay full), capped at tile_rows, shrunk to respect the VMEM budget.
    row_mult = 16 if x_itemsize < 4 else 8
    tm = min(tile_rows, _round_up(n_rows, row_mult))
    tm = _round_up(tm, row_mult)

    def _vmem_bytes(tm_):
        # Double-buffered accounting (BlockSpec default), weights included.
        resident = 2 * (pacdim * d1p * w_itemsize + d1p * d2p * w_itemsize
                        + (d1p + d2p) * 4 + d2p * 128 * 4 + 128 * 4)
        streamed = 2 * tm_ * pacdim * x_itemsize + 2 * tm_ * 128 * 4
        return resident + streamed

    VMEM_BUDGET = 40 * 1024 * 1024  # safe across v5e/v6e/v7x scoped limits
    while tm > row_mult and _vmem_bytes(tm) > VMEM_BUDGET:
        tm = max(row_mult, _round_up(tm // 2, row_mult))
    vmem_limit = int(min(_vmem_bytes(tm) + (4 << 20), 128 << 20))

    # No row padding: ragged last block handled by Pallas (OOB reads clamped,
    # OOB writes masked). Per-row computation is independent, so garbage rows
    # in the last partial tile are harmless.
    grid = (pl.cdiv(n_rows, tm),)

    # x / out are tiled over rows; weights & biases stay resident (constant
    # index_map -> fetched once, no per-step re-DMA).
    x_spec = pl.BlockSpec((tm, pacdim), lambda i: (i, 0))
    w1_spec = pl.BlockSpec((pacdim, d1p), lambda i: (0, 0))
    b1_spec = pl.BlockSpec((1, d1p), lambda i: (0, 0))
    w2_spec = pl.BlockSpec((d1p, d2p), lambda i: (0, 0))
    b2_spec = pl.BlockSpec((1, d2p), lambda i: (0, 0))
    w3_spec = pl.BlockSpec((d2p, 128), lambda i: (0, 0))
    b3_spec = pl.BlockSpec((1, 128), lambda i: (0, 0))
    out_spec = pl.BlockSpec((tm, 128), lambda i: (i, 0))

    flops = 2 * n_rows * (pacdim * d1p + d1p * d2p + d2p * 128)
    bytes_accessed = (n_rows * pacdim * x_itemsize                    # x
                      + (pacdim * d1p + d1p * d2p) * w_itemsize       # W1, W2
                      + (d1p + d2p + d2p * 128 + 128) * 4             # biases, w3
                      + n_rows * 128 * 4)                             # out
    cost = pl.CostEstimate(flops=flops, transcendentals=0,
                           bytes_accessed=bytes_accessed)

    out_full = pl.pallas_call(
        _discriminator_kernel,
        out_shape=jax.ShapeDtypeStruct((n_rows, 128), jnp.float32),
        grid=grid,
        in_specs=[x_spec, w1_spec, b1_spec, w2_spec, b2_spec, w3_spec, b3_spec],
        out_specs=out_spec,
        compiler_params=pltpu.CompilerParams(
            dimension_semantics=("parallel",),
            vmem_limit_bytes=vmem_limit),
        cost_estimate=cost,
    )(x_p, w1p, b1p, w2p, b2p, w3p, b3p)

    # Real result lives in column 0 of the lane-dense output block.
    return out_full[:, :1]


def init_params(key, input_dim, discriminator_dim, pac):
    """Deterministic parameter init (shapes match the PyTorch module, weights
    stored transposed as (in, out); biases kept 2D (1, out))."""
    dims = [input_dim * pac] + list(discriminator_dim) + [1]
    params = []
    for i in range(len(dims) - 1):
        fan_in, fan_out = dims[i], dims[i + 1]
        key, kw, kb = jax.random.split(key, 3)
        bound = 1.0 / jnp.sqrt(fan_in)
        w = jax.random.uniform(kw, (fan_in, fan_out), jnp.float32, -bound, bound)
        b = jax.random.uniform(kb, (1, fan_out), jnp.float32, -bound, bound)
        params += [w, b]
    return tuple(params)


def _reference_forward(x, params, pac):
    """Pure-JAX reference (eval-mode dropout = identity)."""
    w1, b1, w2, b2, w3, b3 = params
    B, input_dim = x.shape
    xr = x.reshape(B // pac, input_dim * pac)
    h = xr @ w1 + b1
    h = jnp.where(h > 0, h, 0.2 * h)
    h = h @ w2 + b2
    h = jnp.where(h > 0, h, 0.2 * h)
    return h @ w3 + b3


if __name__ == "__main__":
    # Small, CTGAN-consistent shapes: input_dim=16, pac=2, hidden dims (32, 16).
    input_dim = 16
    pac = 2
    discriminator_dim = (32, 16)

    key = jax.random.PRNGKey(0)
    params = init_params(key, input_dim, discriminator_dim, pac)
    prep_f32 = prepare_params(params, compute_dtype=jnp.float32)
    prep_bf16 = prepare_params(params, compute_dtype=jnp.bfloat16)

    # --- Test 1: small batch (single partial tile), f32, strict tolerance --
    batch = 8  # must be divisible by pac -> n_rows = 4 (< one 8-row tile)
    key, kx = jax.random.split(key)
    x = jax.random.normal(kx, (batch, input_dim), jnp.float32)

    fwd_f32 = jax.jit(functools.partial(discriminator_forward, pac=pac))
    out = fwd_f32(x, prep_f32)
    jax.block_until_ready(out)
    assert out.shape == (batch // pac, 1), out.shape
    assert out.dtype == jnp.float32
    ref = _reference_forward(x, params, pac)
    assert jnp.allclose(out, ref, atol=1e-5, rtol=1e-5)

    # --- Test 2: multiple row tiles + ragged last block, f32 --------------
    batch2 = 60  # n_rows=30, tile_rows=16 -> grid=(2,), last block ragged (30/32)
    key, kx2 = jax.random.split(key)
    x2 = jax.random.normal(kx2, (batch2, input_dim), jnp.float32)
    fwd_tiled = jax.jit(functools.partial(discriminator_forward, pac=pac,
                                          tile_rows=16))
    out2 = fwd_tiled(x2, prep_f32)
    jax.block_until_ready(out2)
    assert out2.shape == (batch2 // pac, 1), out2.shape
    ref2 = _reference_forward(x2, params, pac)
    assert jnp.allclose(out2, ref2, atol=1e-5, rtol=1e-5)

    # --- Test 3: bf16 weights (f32 x streamed, cast in-kernel), loose tol --
    out3 = fwd_tiled(x2, prep_bf16)
    jax.block_until_ready(out3)
    assert out3.shape == (batch2 // pac, 1), out3.shape
    assert out3.dtype == jnp.float32
    assert jnp.allclose(out3, ref2, atol=5e-2, rtol=5e-2)

    print("KERNEL_OK")
</pallas_src>

<mosaic_0001>
module attributes {stable_mosaic.version = 11 : i64} {
  func.func @_discriminator_kernel(%arg0: i32, %arg1: memref<8x32xf32, #tpu.memory_space<vmem>>, %arg2: memref<32x128xf32, #tpu.memory_space<vmem>>, %arg3: memref<1x128xf32, #tpu.memory_space<vmem>>, %arg4: memref<128x128xf32, #tpu.memory_space<vmem>>, %arg5: memref<1x128xf32, #tpu.memory_space<vmem>>, %arg6: memref<128x128xf32, #tpu.memory_space<vmem>>, %arg7: memref<1x128xf32, #tpu.memory_space<vmem>>, %arg8: memref<8x128xf32, #tpu.memory_space<vmem>>) attributes {dimension_semantics = [#tpu.dimension_semantics<parallel>], iteration_bounds = array<i64: 1>, scalar_prefetch = 0 : i64, scratch_operands = 0 : i64, tpu.core_type = #tpu.core_type<tc>, window_params = [{transform_indices = @transform_0, window_bounds = array<i64: 8, 32>}, {pipeline_mode = #tpu.pipeline_mode<synchronous>, transform_indices = @transform_1, window_bounds = array<i64: 32, 128>}, {pipeline_mode = #tpu.pipeline_mode<synchronous>, transform_indices = @transform_2, window_bounds = array<i64: 1, 128>}, {pipeline_mode = #tpu.pipeline_mode<synchronous>, transform_indices = @transform_3, window_bounds = array<i64: 128, 128>}, {pipeline_mode = #tpu.pipeline_mode<synchronous>, transform_indices = @transform_4, window_bounds = array<i64: 1, 128>}, {pipeline_mode = #tpu.pipeline_mode<synchronous>, transform_indices = @transform_5, window_bounds = array<i64: 128, 128>}, {pipeline_mode = #tpu.pipeline_mode<synchronous>, transform_indices = @transform_6, window_bounds = array<i64: 1, 128>}, {transform_indices = @transform_7, window_bounds = array<i64: 8, 128>}]} {
    %c0 = arith.constant 0 : index
    %c0_0 = arith.constant 0 : index
    %0 = vector.load %arg1[%c0, %c0_0] : memref<8x32xf32, #tpu.memory_space<vmem>>, vector<8x32xf32>
    %c0_1 = arith.constant 0 : index
    %c0_2 = arith.constant 0 : index
    %1 = vector.load %arg2[%c0_1, %c0_2] : memref<32x128xf32, #tpu.memory_space<vmem>>, vector<32x128xf32>
    %cst = arith.constant dense<0.000000e+00> : vector<8x128xf32>
    %2 = tpu.matmul %0, %1, %cst {dimension_numbers = #tpu.dot_dimension_numbers<[1], [0], [0], [1], [0, 0, 1, 1], [], []>} : vector<8x32xf32>, vector<32x128xf32>, vector<8x128xf32> -> vector<8x128xf32>
    %c0_3 = arith.constant 0 : index
    %c0_4 = arith.constant 0 : index
    %3 = vector.load %arg3[%c0_3, %c0_4] : memref<1x128xf32, #tpu.memory_space<vmem>>, vector<1x128xf32>
    %4 = vector.broadcast %3 : vector<1x128xf32> to vector<8x128xf32>
    %5 = arith.addf %2, %4 : vector<8x128xf32>
    %cst_5 = arith.constant 2.000000e-01 : f32
    %6 = vector.broadcast %cst_5 : f32 to vector<8x128xf32>
    %7 = arith.mulf %6, %5 : vector<8x128xf32>
    %8 = arith.maximumf %5, %7 : vector<8x128xf32>
    %c0_6 = arith.constant 0 : index
    %c0_7 = arith.constant 0 : index
    %9 = vector.load %arg4[%c0_6, %c0_7] : memref<128x128xf32, #tpu.memory_space<vmem>>, vector<128x128xf32>
    %cst_8 = arith.constant dense<0.000000e+00> : vector<8x128xf32>
    %10 = tpu.matmul %8, %9, %cst_8 {dimension_numbers = #tpu.dot_dimension_numbers<[1], [0], [0], [1], [0, 0, 1, 1], [], []>} : vector<8x128xf32>, vector<128x128xf32>, vector<8x128xf32> -> vector<8x128xf32>
    %c0_9 = arith.constant 0 : index
    %c0_10 = arith.constant 0 : index
    %11 = vector.load %arg5[%c0_9, %c0_10] : memref<1x128xf32, #tpu.memory_space<vmem>>, vector<1x128xf32>
    %12 = vector.broadcast %11 : vector<1x128xf32> to vector<8x128xf32>
    %13 = arith.addf %10, %12 : vector<8x128xf32>
    %cst_11 = arith.constant 2.000000e-01 : f32
    %14 = vector.broadcast %cst_11 : f32 to vector<8x128xf32>
    %15 = arith.mulf %14, %13 : vector<8x128xf32>
    %16 = arith.maximumf %13, %15 : vector<8x128xf32>
    %c0_12 = arith.constant 0 : index
    %c0_13 = arith.constant 0 : index
    %17 = vector.load %arg6[%c0_12, %c0_13] : memref<128x128xf32, #tpu.memory_space<vmem>>, vector<128x128xf32>
    %cst_14 = arith.constant dense<0.000000e+00> : vector<8x128xf32>
    %18 = tpu.matmul %16, %17, %cst_14 {dimension_numbers = #tpu.dot_dimension_numbers<[1], [0], [0], [1], [0, 0, 1, 1], [], []>} : vector<8x128xf32>, vector<128x128xf32>, vector<8x128xf32> -> vector<8x128xf32>
    %c0_15 = arith.constant 0 : index
    %c0_16 = arith.constant 0 : index
    %19 = vector.load %arg7[%c0_15, %c0_16] : memref<1x128xf32, #tpu.memory_space<vmem>>, vector<1x128xf32>
    %20 = vector.broadcast %19 : vector<1x128xf32> to vector<8x128xf32>
    %21 = arith.addf %18, %20 : vector<8x128xf32>
    %c0_17 = arith.constant 0 : index
    %c0_18 = arith.constant 0 : index
    %22 = vector.load %arg8[%c0_17, %c0_18] : memref<8x128xf32, #tpu.memory_space<vmem>>, vector<8x128xf32>
    tpu.vector_store %arg8[%c0_17, %c0_18], %21 {strides = array<i32>} : memref<8x128xf32, #tpu.memory_space<vmem>>, vector<8x128xf32>,
    return
  }
  func.func @transform_0(%arg0: i32) -> (i32, i32) {
    %c0_i32 = arith.constant 0 : i32
    %c0_i32_0 = arith.constant 0 : i32
    return %arg0, %c0_i32 : i32, i32
  }
  func.func @transform_1(%arg0: i32) -> (i32, i32) {
    %c0_i32 = arith.constant 0 : i32
    %c0_i32_0 = arith.constant 0 : i32
    %c0_i32_1 = arith.constant 0 : i32
    return %c0_i32, %c0_i32_0 : i32, i32
  }
  func.func @transform_2(%arg0: i32) -> (i32, i32) {
    %c0_i32 = arith.constant 0 : i32
    %c0_i32_0 = arith.constant 0 : i32
    %c0_i32_1 = arith.constant 0 : i32
    return %c0_i32, %c0_i32_0 : i32, i32
  }
  func.func @transform_3(%arg0: i32) -> (i32, i32) {
    %c0_i32 = arith.constant 0 : i32
    %c0_i32_0 = arith.constant 0 : i32
    %c0_i32_1 = arith.constant 0 : i32
    return %c0_i32, %c0_i32_0 : i32, i32
  }
  func.func @transform_4(%arg0: i32) -> (i32, i32) {
    %c0_i32 = arith.constant 0 : i32
    %c0_i32_0 = arith.constant 0 : i32
    %c0_i32_1 = arith.constant 0 : i32
    return %c0_i32, %c0_i32_0 : i32, i32
  }
  func.func @transform_5(%arg0: i32) -> (i32, i32) {
    %c0_i32 = arith.constant 0 : i32
    %c0_i32_0 = arith.constant 0 : i32
    %c0_i32_1 = arith.constant 0 : i32
    return %c0_i32, %c0_i32_0 : i32, i32
  }
  func.func @transform_6(%arg0: i32) -> (i32, i32) {
    %c0_i32 = arith.constant 0 : i32
    %c0_i32_0 = arith.constant 0 : i32
    %c0_i32_1 = arith.constant 0 : i32
    return %c0_i32, %c0_i32_0 : i32, i32
  }
  func.func @transform_7(%arg0: i32) -> (i32, i32) {
    %c0_i32 = arith.constant 0 : i32
    %c0_i32_0 = arith.constant 0 : i32
    return %arg0, %c0_i32 : i32, i32
  }
}

</mosaic_0001>

<llo_original>
// kernel: discriminator_forward.1
$region0: #{discriminator_forward.1}
  #allocation0 [shape = 'u32[]', space=smem, size = 0x4, offset = 0x4, fixed_abs, tag = 'smem constant byte address 0x4 - core index']
  #allocation1 [shape = 'u32[144,128]{1,0:T(1,128)}', space=vmem, size = 0x12000, scoped, tag = 'internal scratch']
  %s0 = inlined_call_operand.vmem [shape: f32[4,32], index: 0, kind: input, shape index: {}]
  %s1 = inlined_call_operand.hbm [shape: f32[32,128], index: 1, kind: input, shape index: {}]
  %s2 = inlined_call_operand.vmem [shape: f32[1,128], index: 2, kind: input, shape index: {}]
  %s3 = inlined_call_operand.hbm [shape: f32[128,128], index: 3, kind: input, shape index: {}]
  %s4 = inlined_call_operand.vmem [shape: f32[1,128], index: 4, kind: input, shape index: {}]
  %s5 = inlined_call_operand.hbm [shape: f32[128,128], index: 5, kind: input, shape index: {}]
  %s6 = inlined_call_operand.vmem [shape: f32[1,128], index: 6, kind: input, shape index: {}]
  %s7 = inlined_call_operand.vmem [shape: f32[4,128], index: 7, kind: output, shape index: {}]
  %s8 = sld [smem:[#allocation0]]
  $region80: #{discriminator_forward.1} parent=0
    _
  %s10 = ssub.s32 1, %s8
  %s11 = scalar_select 0, %s10, %s8
  $region1: #{discriminator_forward.1} parent=0
    #allocation2 [shape = 'u8[16384]{0}', space=vmem, size = 0x4000, scoped, tag = 'input window, operand 1, single buffered']
    #allocation3 [shape = 's32[1]{0}', space=sflag, size = 0x4, scoped, tag = 'scoped memory for discriminator_forward.1']
    #allocation4 [shape = 'u8[65536]{0}', space=vmem, size = 0x10000, scoped, tag = 'input window, operand 3, single buffered']
    #allocation5 [shape = 's32[1]{0}', space=sflag, size = 0x4, scoped, tag = 'scoped memory for discriminator_forward.1']
    #allocation6 [shape = 'u8[65536]{0}', space=vmem, size = 0x10000, scoped, tag = 'input window, operand 5, single buffered']
    #allocation7 [shape = 'u8[4096]{0}', space=vmem, size = 0x1000, scoped, tag = 'output window, operand 0, single buffered']
    %12 = vsyncpa [#allocation3], 0
    %13 = vsyncpa [#allocation5], 0
    // Predicated region
    $region2: #{discriminator_forward.1} parent=1 // pred_check
      _
    $region3: #{discriminator_forward.1} parent=1 // pred_check_branch
      %15 = sbr.rel (0) target = $region5
    $region4: #{discriminator_forward.1} parent=1 // pred_region
      _
    $region5: #{discriminator_forward.1} parent=1 // pred_fallthru
      _
    // Predicated region
    $region6: #{discriminator_forward.1} parent=1 // pred_check
      _
    $region7: #{discriminator_forward.1} parent=1 // pred_check_branch
      %17 = sbr.rel (0) target = $region9
    $region8: #{discriminator_forward.1} parent=1 // pred_region
      %s19 = ssub.s32 512, 512
      %20 = vsyncadd [#allocation3], %s19
      %s21 = sshll.u32 [#allocation2], 4
      %s22 = int_to_ptr.vmem [resolvable:$true] %s21
      %27 = dma.hbm_to_vmem [thread:$0]  %s1, 512, %s22, [#allocation3], 128, 128, 8
    $region9: #{discriminator_forward.1} parent=1 // pred_fallthru
      _
    // Predicated region
    $region10: #{discriminator_forward.1} parent=1 // pred_check
      _
    $region11: #{discriminator_forward.1} parent=1 // pred_check_branch
      %29 = sbr.rel (0) target = $region13
    $region12: #{discriminator_forward.1} parent=1 // pred_region
      _
    $region13: #{discriminator_forward.1} parent=1 // pred_fallthru
      _
    // Predicated region
    $region14: #{discriminator_forward.1} parent=1 // pred_check
      _
    $region15: #{discriminator_forward.1} parent=1 // pred_check_branch
      %31 = sbr.rel (0) target = $region17
    $region16: #{discriminator_forward.1} parent=1 // pred_region
      %s33 = ssub.s32 2048, 2048
      %34 = vsyncadd [#allocation5], %s33
      %s35 = sshll.u32 [#allocation4], 4
      %s36 = int_to_ptr.vmem [resolvable:$true] %s35
      %41 = dma.hbm_to_vmem [thread:$0]  %s3, 2048, %s36, [#allocation5], 128, 128, 8
    $region17: #{discriminator_forward.1} parent=1 // pred_fallthru
      _
    // Predicated region
    $region18: #{discriminator_forward.1} parent=1 // pred_check
      _
    $region19: #{discriminator_forward.1} parent=1 // pred_check_branch
      %43 = sbr.rel (0) target = $region21
    $region20: #{discriminator_forward.1} parent=1 // pred_region
      _
    $region21: #{discriminator_forward.1} parent=1 // pred_fallthru
      _
    // Predicated region
    $region22: #{discriminator_forward.1} parent=1 // pred_check
      _
    $region23: #{discriminator_forward.1} parent=1 // pred_check_branch
      %45 = sbr.rel (0) target = $region25
    $region24: #{discriminator_forward.1} parent=1 // pred_region
      %s47 = ssub.s32 2048, 2048
      %48 = vsyncadd [#allocation5], %s47
      %s49 = sshll.u32 [#allocation6], 4
      %s50 = int_to_ptr.vmem [resolvable:$true] %s49
      %55 = dma.hbm_to_vmem [thread:$0]  %s5, 2048, %s50, [#allocation5], 128, 128, 8
    $region25: #{discriminator_forward.1} parent=1 // pred_fallthru
      _
    // Predicated region
    $region26: #{discriminator_forward.1} parent=1 // pred_check
      _
    $region27: #{discriminator_forward.1} parent=1 // pred_check_branch
      %57 = sbr.rel (0) target = $region29
    $region28: #{discriminator_forward.1} parent=1 // pred_region
      _
    $region29: #{discriminator_forward.1} parent=1 // pred_fallthru
      _
    // Predicated region
    $region30: #{discriminator_forward.1} parent=1 // pred_check
      _
    $region31: #{discriminator_forward.1} parent=1 // pred_check_branch
      %59 = sbr.rel (0) target = $region33
    $region32: #{discriminator_forward.1} parent=1 // pred_region
      %60 = dma.done [#allocation3], 512
    $region33: #{discriminator_forward.1} parent=1 // pred_fallthru
      _
    // Predicated region
    $region34: #{discriminator_forward.1} parent=1 // pred_check
      _
    $region35: #{discriminator_forward.1} parent=1 // pred_check_branch
      %62 = sbr.rel (0) target = $region37
    $region36: #{discriminator_forward.1} parent=1 // pred_region
      %63 = dma.done [#allocation5], 2048
    $region37: #{discriminator_forward.1} parent=1 // pred_fallthru
      _
    // Predicated region
    $region38: #{discriminator_forward.1} parent=1 // pred_check
      _
    $region39: #{discriminator_forward.1} parent=1 // pred_check_branch
      %65 = sbr.rel (0) target = $region41
    $region40: #{discriminator_forward.1} parent=1 // pred_region
      %66 = dma.done [#allocation5], 2048
    $region41: #{discriminator_forward.1} parent=1 // pred_fallthru
      _
    %v67 = vld [vmem:[%s0] sm:$0xff]
    %v68 = vld [vmem:[#allocation2] sm:$0xff]
    %v69 = vld [vmem:[#allocation2 + $0x8] sm:$0xff]
    %v70 = vld [vmem:[#allocation2 + $0x10] sm:$0xff]
    %v71 = vld [vmem:[#allocation2 + $0x18] sm:$0xff]
    %v72 = vld [vmem:[%s2] sm:$0x1]
    %v74 = vlaneseq
    %v75 = vshrl.u32 %v74, 7
    %v76 = vsub.s32 0, %v75
    %v77 = vrot.slane %v72, %v76
    %vm79 = vcmask 261120
    %v81 = vsel %vm79, %v67, 0
    %83 = vmatprep.subr.mxu0 0.0
    %84 = vmatpush1.msra.mxu0 %v68
    %85 = vmatprep.subr.mxu0 0.0
    %86 = vmatpush1.msra.mxu0 %v69
    %87 = vmatprep.subr.mxu0 0.0
    %88 = vmatpush1.msra.mxu0 %v70
    %89 = vmatprep.subr.mxu0 0.0
    %90 = vmatpush1.msra.mxu0 %v71
    %91 = vmatprep.subr.mxu0 0.0
    %92 = vmatpush1.msra.mxu0 0.0
    %93 = vmatprep.subr.mxu0 0.0
    %94 = vmatpush1.msra.mxu0 0.0
    %95 = vmatprep.subr.mxu0 0.0
    %96 = vmatpush1.msra.mxu0 0.0
    %97 = vmatprep.subr.mxu0 0.0
    %98 = vmatpush1.msra.mxu0 0.0
    %99 = vmatprep.subr.mxu0 0.0
    %100 = vmatpush1.msra.mxu0 0.0
    %101 = vmatprep.subr.mxu0 0.0
    %102 = vmatpush1.msra.mxu0 0.0
    %103 = vmatprep.subr.mxu0 0.0
    %104 = vmatpush1.msra.mxu0 0.0
    %105 = vmatprep.subr.mxu0 0.0
    %106 = vmatpush1.msra.mxu0 0.0
    %107 = vmatprep.subr.mxu0 0.0
    %108 = vmatpush1.msra.mxu0 0.0
    %109 = vmatprep.subr.mxu0 0.0
    %110 = vmatpush1.msra.mxu0 0.0
    %111 = vmatprep.subr.mxu0 0.0
    %112 = vmatpush1.msra.mxu0 0.0
    %113 = vmatprep.subr.mxu0 0.0
    %114 = vmatpush1.msra.mxu0 0.0
    %115 = vmatprep.subr.mxu0 0.0
    %116 = vmatpush1.msra.mxu0 0.0
    %117 = vmatprep.subr.mxu0 0.0
    %118 = vmatpush1.msra.mxu0 0.0
    %119 = vmatprep.subr.mxu0 0.0
    %120 = vmatpush1.msra.mxu0 0.0
    %121 = vmatprep.subr.mxu0 0.0
    %122 = vmatpush1.msra.mxu0 0.0
    %123 = vmatprep.subr.mxu0 0.0
    %124 = vmatpush1.msra.mxu0 0.0
    %125 = vmatprep.subr.mxu0 0.0
    %126 = vmatpush1.msra.mxu0 0.0
    %127 = vmatprep.subr.mxu0 0.0
    %128 = vmatpush1.msra.mxu0 0.0
    %129 = vmatprep.subr.mxu0 0.0
    %130 = vmatpush1.msra.mxu0 0.0
    %131 = vmatprep.subr.mxu0 0.0
    %132 = vmatpush1.msra.mxu0 0.0
    %133 = vmatprep.subr.mxu0 0.0
    %134 = vmatpush1.msra.mxu0 0.0
    %135 = vmatprep.subr.mxu0 0.0
    %136 = vmatpush1.msra.mxu0 0.0
    %137 = vmatprep.subr.mxu0 0.0
    %138 = vmatpush1.msra.mxu0 0.0
    %139 = vmatprep.subr.mxu0 0.0
    %140 = vmatpush1.msra.mxu0 0.0
    %141 = vmatprep.subr.mxu0 0.0
    %142 = vmatpush1.msra.mxu0 0.0
    %143 = vmatprep.subr.mxu0 0.0
    %144 = vmatpush1.msra.mxu0 0.0
    %145 = vmatprep.subr.mxu0 0.0
    %146 = vmatpush1.msra.mxu0 0.0
    %147 = vmatprep.mubr.f32.mxu0 0.0
    %148 = vmatmul.mubr.f32.gmra.mrb[0].mxu0 %v81
    %v149 = vpop.f32.mrb[0].mxu0
    %v150 = vadd.f32 %v77, %v149
    %v151 = vpop.f32.mrb[0].mxu0
    %152 = vdwg.mxu0
    %v153 = vmul.f32 %v150, 0.2
    %v154 = vmax.f32 %v150, %v153
    %v155 = vld [vmem:[#allocation4] sm:$0xff]
    %v156 = vld [vmem:[#allocation4 + $0x8] sm:$0xff]
    %v157 = vld [vmem:[#allocation4 + $0x10] sm:$0xff]
    %v158 = vld [vmem:[#allocation4 + $0x18] sm:$0xff]
    %v159 = vld [vmem:[#allocation4 + $0x20] sm:$0xff]
    %v160 = vld [vmem:[#allocation4 + $0x28] sm:$0xff]
    %v161 = vld [vmem:[#allocation4 + $0x30] sm:$0xff]
    %v162 = vld [vmem:[#allocation4 + $0x38] sm:$0xff]
    %v163 = vld [vmem:[#allocation4 + $0x40] sm:$0xff]
    %v164 = vld [vmem:[#allocation4 + $0x48] sm:$0xff]
    %v165 = vld [vmem:[#allocation4 + $0x50] sm:$0xff]
    %v166 = vld [vmem:[#allocation4 + $0x58] sm:$0xff]
    %v167 = vld [vmem:[#allocation4 + $0x60] sm:$0xff]
    %v168 = vld [vmem:[#allocation4 + $0x68] sm:$0xff]
    %v169 = vld [vmem:[#allocation4 + $0x70] sm:$0xff]
    %v170 = vld [vmem:[#allocation4 + $0x78] sm:$0xff]
    %v171 = vld [vmem:[%s4] sm:$0x1]
    %v173 = vlaneseq
    %v174 = vshrl.u32 %v173, 7
    %v175 = vsub.s32 0, %v174
    %v176 = vrot.slane %v171, %v175
    %178 = vmatprep.subr.mxu0 0.0
    %179 = vmatpush1.msra.mxu0 %v155
    %180 = vmatprep.subr.mxu0 0.0
    %181 = vmatpush1.msra.mxu0 %v156
    %182 = vmatprep.subr.mxu0 0.0
    %183 = vmatpush1.msra.mxu0 %v157
    %184 = vmatprep.subr.mxu0 0.0
    %185 = vmatpush1.msra.mxu0 %v158
    %186 = vmatprep.subr.mxu0 0.0
    %187 = vmatpush1.msra.mxu0 %v159
    %188 = vmatprep.subr.mxu0 0.0
    %189 = vmatpush1.msra.mxu0 %v160
    %190 = vmatprep.subr.mxu0 0.0
    %191 = vmatpush1.msra.mxu0 %v161
    %192 = vmatprep.subr.mxu0 0.0
    %193 = vmatpush1.msra.mxu0 %v162
    %194 = vmatprep.subr.mxu0 0.0
    %195 = vmatpush1.msra.mxu0 %v163
    %196 = vmatprep.subr.mxu0 0.0
    %197 = vmatpush1.msra.mxu0 %v164
    %198 = vmatprep.subr.mxu0 0.0
    %199 = vmatpush1.msra.mxu0 %v165
    %200 = vmatprep.subr.mxu0 0.0
    %201 = vmatpush1.msra.mxu0 %v166
    %202 = vmatprep.subr.mxu0 0.0
    %203 = vmatpush1.msra.mxu0 %v167
    %204 = vmatprep.subr.mxu0 0.0
    %205 = vmatpush1.msra.mxu0 %v168
    %206 = vmatprep.subr.mxu0 0.0
    %207 = vmatpush1.msra.mxu0 %v169
    %208 = vmatprep.subr.mxu0 0.0
    %209 = vmatpush1.msra.mxu0 %v170
    %210 = vmatprep.subr.mxu0 0.0
    %211 = vmatpush1.msra.mxu0 0.0
    %212 = vmatprep.subr.mxu0 0.0
    %213 = vmatpush1.msra.mxu0 0.0
    %214 = vmatprep.subr.mxu0 0.0
    %215 = vmatpush1.msra.mxu0 0.0
    %216 = vmatprep.subr.mxu0 0.0
    %217 = vmatpush1.msra.mxu0 0.0
    %218 = vmatprep.subr.mxu0 0.0
    %219 = vmatpush1.msra.mxu0 0.0
    %220 = vmatprep.subr.mxu0 0.0
    %221 = vmatpush1.msra.mxu0 0.0
    %222 = vmatprep.subr.mxu0 0.0
    %223 = vmatpush1.msra.mxu0 0.0
    %224 = vmatprep.subr.mxu0 0.0
    %225 = vmatpush1.msra.mxu0 0.0
    %226 = vmatprep.subr.mxu0 0.0
    %227 = vmatpush1.msra.mxu0 0.0
    %228 = vmatprep.subr.mxu0 0.0
    %229 = vmatpush1.msra.mxu0 0.0
    %230 = vmatprep.subr.mxu0 0.0
    %231 = vmatpush1.msra.mxu0 0.0
    %232 = vmatprep.subr.mxu0 0.0
    %233 = vmatpush1.msra.mxu0 0.0
    %234 = vmatprep.subr.mxu0 0.0
    %235 = vmatpush1.msra.mxu0 0.0
    %236 = vmatprep.subr.mxu0 0.0
    %237 = vmatpush1.msra.mxu0 0.0
    %238 = vmatprep.subr.mxu0 0.0
    %239 = vmatpush1.msra.mxu0 0.0
    %240 = vmatprep.subr.mxu0 0.0
    %241 = vmatpush1.msra.mxu0 0.0
    %242 = vmatprep.mubr.f32.mxu0 0.0
    %243 = vmatmul.mubr.f32.gmra.mrb[0].mxu0 %v154
    %v244 = vpop.f32.mrb[0].mxu0
    %v245 = vadd.f32 %v176, %v244
    %v246 = vpop.f32.mrb[0].mxu0
    %247 = vdwg.mxu0
    %v248 = vmul.f32 %v245, 0.2
    %v249 = vmax.f32 %v245, %v248
    %v250 = vld [vmem:[#allocation6] sm:$0xff]
    %v251 = vld [vmem:[#allocation6 + $0x8] sm:$0xff]
    %v252 = vld [vmem:[#allocation6 + $0x10] sm:$0xff]
    %v253 = vld [vmem:[#allocation6 + $0x18] sm:$0xff]
    %v254 = vld [vmem:[#allocation6 + $0x20] sm:$0xff]
    %v255 = vld [vmem:[#allocation6 + $0x28] sm:$0xff]
    %v256 = vld [vmem:[#allocation6 + $0x30] sm:$0xff]
    %v257 = vld [vmem:[#allocation6 + $0x38] sm:$0xff]
    %v258 = vld [vmem:[#allocation6 + $0x40] sm:$0xff]
    %v259 = vld [vmem:[#allocation6 + $0x48] sm:$0xff]
    %v260 = vld [vmem:[#allocation6 + $0x50] sm:$0xff]
    %v261 = vld [vmem:[#allocation6 + $0x58] sm:$0xff]
    %v262 = vld [vmem:[#allocation6 + $0x60] sm:$0xff]
    %v263 = vld [vmem:[#allocation6 + $0x68] sm:$0xff]
    %v264 = vld [vmem:[#allocation6 + $0x70] sm:$0xff]
    %v265 = vld [vmem:[#allocation6 + $0x78] sm:$0xff]
    %v266 = vld [vmem:[%s6] sm:$0x1]
    %v268 = vlaneseq
    %v269 = vshrl.u32 %v268, 7
    %v270 = vsub.s32 0, %v269
    %v271 = vrot.slane %v266, %v270
    %273 = vmatprep.subr.mxu0 0.0
    %274 = vmatpush1.msra.mxu0 %v250
    %275 = vmatprep.subr.mxu0 0.0
    %276 = vmatpush1.msra.mxu0 %v251
    %277 = vmatprep.subr.mxu0 0.0
    %278 = vmatpush1.msra.mxu0 %v252
    %279 = vmatprep.subr.mxu0 0.0
    %280 = vmatpush1.msra.mxu0 %v253
    %281 = vmatprep.subr.mxu0 0.0
    %282 = vmatpush1.msra.mxu0 %v254
    %283 = vmatprep.subr.mxu0 0.0
    %284 = vmatpush1.msra.mxu0 %v255
    %285 = vmatprep.subr.mxu0 0.0
    %286 = vmatpush1.msra.mxu0 %v256
    %287 = vmatprep.subr.mxu0 0.0
    %288 = vmatpush1.msra.mxu0 %v257
    %289 = vmatprep.subr.mxu0 0.0
    %290 = vmatpush1.msra.mxu0 %v258
    %291 = vmatprep.subr.mxu0 0.0
    %292 = vmatpush1.msra.mxu0 %v259
    %293 = vmatprep.subr.mxu0 0.0
    %294 = vmatpush1.msra.mxu0 %v260
    %295 = vmatprep.subr.mxu0 0.0
    %296 = vmatpush1.msra.mxu0 %v261
    %297 = vmatprep.subr.mxu0 0.0
    %298 = vmatpush1.msra.mxu0 %v262
    %299 = vmatprep.subr.mxu0 0.0
    %300 = vmatpush1.msra.mxu0 %v263
    %301 = vmatprep.subr.mxu0 0.0
    %302 = vmatpush1.msra.mxu0 %v264
    %303 = vmatprep.subr.mxu0 0.0
    %304 = vmatpush1.msra.mxu0 %v265
    %305 = vmatprep.subr.mxu0 0.0
    %306 = vmatpush1.msra.mxu0 0.0
    %307 = vmatprep.subr.mxu0 0.0
    %308 = vmatpush1.msra.mxu0 0.0
    %309 = vmatprep.subr.mxu0 0.0
    %310 = vmatpush1.msra.mxu0 0.0
    %311 = vmatprep.subr.mxu0 0.0
    %312 = vmatpush1.msra.mxu0 0.0
    %313 = vmatprep.subr.mxu0 0.0
    %314 = vmatpush1.msra.mxu0 0.0
    %315 = vmatprep.subr.mxu0 0.0
    %316 = vmatpush1.msra.mxu0 0.0
    %317 = vmatprep.subr.mxu0 0.0
    %318 = vmatpush1.msra.mxu0 0.0
    %319 = vmatprep.subr.mxu0 0.0
    %320 = vmatpush1.msra.mxu0 0.0
    %321 = vmatprep.subr.mxu0 0.0
    %322 = vmatpush1.msra.mxu0 0.0
    %323 = vmatprep.subr.mxu0 0.0
    %324 = vmatpush1.msra.mxu0 0.0
    %325 = vmatprep.subr.mxu0 0.0
    %326 = vmatpush1.msra.mxu0 0.0
    %327 = vmatprep.subr.mxu0 0.0
    %328 = vmatpush1.msra.mxu0 0.0
    %329 = vmatprep.subr.mxu0 0.0
    %330 = vmatpush1.msra.mxu0 0.0
    %331 = vmatprep.subr.mxu0 0.0
    %332 = vmatpush1.msra.mxu0 0.0
    %333 = vmatprep.subr.mxu0 0.0
    %334 = vmatpush1.msra.mxu0 0.0
    %335 = vmatprep.subr.mxu0 0.0
    %336 = vmatpush1.msra.mxu0 0.0
    %337 = vmatprep.mubr.f32.mxu0 0.0
    %338 = vmatmul.mubr.f32.gmra.mrb[0].mxu0 %v249
    %v339 = vpop.f32.mrb[0].mxu0
    %v340 = vadd.f32 %v271, %v339
    %v341 = vpop.f32.mrb[0].mxu0
    %342 = vdwg.mxu0
    %343 = vst [vmem:[#allocation7] sm:$0xff] %v340
    // Predicated region
    $region42: #{discriminator_forward.1} parent=1 // pred_check
      _
    $region43: #{discriminator_forward.1} parent=1 // pred_check_branch
      %345 = sbr.rel (0) target = $region45
    $region44: #{discriminator_forward.1} parent=1 // pred_region
      // Predicated region
      $region46: #{discriminator_forward.1} parent=44 // pred_check
        _
      $region47: #{discriminator_forward.1} parent=44 // pred_check_branch
        %347 = sbr.rel (0) target = $region49
      $region48: #{discriminator_forward.1} parent=44 // pred_region
        // Predicated region
        $region50: #{discriminator_forward.1} parent=48 // pred_check
          _
        $region51: #{discriminator_forward.1} parent=48 // pred_check_branch
          %349 = sbr.rel target = $region53
        $region52: #{discriminator_forward.1} parent=48 // pred_region
          // Predicated region
          $region65: #{discriminator_forward.1} parent=52 // pred_check
            _
          $region66: #{discriminator_forward.1} parent=52 // pred_check_branch
            %364 = sbr.rel (0) target = $region68
          $region67: #{discriminator_forward.1} parent=52 // pred_region
            loop: start=0, step=1, limit=1
            $region69: #{discriminator_forward.1} parent=67 // loop_pre_header
              _
            $region70: #{discriminator_forward.1} parent=67 // loop_header
              %s367 = sphi 0, %s371
              %p368 = scmp.ge.s32.totalorder %s367, 1
              %s372 = sphi [#allocation7], [#allocation7]
              %s373 = sphi %s7, %s7
            $region71: #{discriminator_forward.1} parent=67 // loop_header_branch
              %370 = sbr.rel (%p368) target = $region75
            $region72: #{discriminator_forward.1} parent=67 // loop_body
              %v374 = vld [vmem:[%s372] sm:$0xf]
              %375 = vst [vmem:[%s373] sm:$0xf] %v374
            $region73: #{discriminator_forward.1} parent=67 // loop_footer
              %s371 = sadd.s32 1, %s367
            $region74: #{discriminator_forward.1} parent=67 // loop_footer_branch
              %366 = sbr.rel target = $region70
            $region75: #{discriminator_forward.1} parent=67 // loop_exit
              _
          $region68: #{discriminator_forward.1} parent=52 // pred_fallthru
            _
        $region53: #{discriminator_forward.1} parent=48 // pred_fallthru
          _
        // Predicated region
        $region54: #{discriminator_forward.1} parent=48 // pred_check
          _
        $region55: #{discriminator_forward.1} parent=48 // pred_check_branch
          %351 = sbr.rel (0) target = $region57
        $region56: #{discriminator_forward.1} parent=48 // pred_region
          loop: start=0, step=1, limit=1
          $region58: #{discriminator_forward.1} parent=56 // loop_pre_header
            _
          $region59: #{discriminator_forward.1} parent=56 // loop_header
            %s354 = sphi 0, %s358
            %p355 = scmp.ge.s32.totalorder %s354, 1
            %s359 = sphi [#allocation7], [#allocation7]
            %s360 = sphi %s7, %s7
          $region60: #{discriminator_forward.1} parent=56 // loop_header_branch
            %357 = sbr.rel (%p355) target = $region64
          $region61: #{discriminator_forward.1} parent=56 // loop_body
            %v361 = vld [vmem:[%s359] sm:$0xf]
            %362 = vst [vmem:[%s360] sm:$0xf] %v361
          $region62: #{discriminator_forward.1} parent=56 // loop_footer
            %s358 = sadd.s32 1, %s354
          $region63: #{discriminator_forward.1} parent=56 // loop_footer_branch
            %353 = sbr.rel target = $region59
          $region64: #{discriminator_forward.1} parent=56 // loop_exit
            _
        $region57: #{discriminator_forward.1} parent=48 // pred_fallthru
          _
      $region49: #{discriminator_forward.1} parent=44 // pred_fallthru
        _
      %376 = vnop
    $region45: #{discriminator_forward.1} parent=1 // pred_fallthru
      _
    // Predicated region
    $region76: #{discriminator_forward.1} parent=1 // pred_check
      _
    $region77: #{discriminator_forward.1} parent=1 // pred_check_branch
      %378 = sbr.rel (0) target = $region79
    $region78: #{discriminator_forward.1} parent=1 // pred_region
      _
    $region79: #{discriminator_forward.1} parent=1 // pred_fallthru
      _
    %379 = vsyncpa [#allocation3], 1
    %380 = vsyncpa [#allocation5], 1

</llo_original>
